<compile_context>
chip_gen: v5e
topology: v5e:2x2
jax: 0.10.0
libtpu: 0.0.40
codegen_flags: <defaults>
</compile_context>

<pallas_src>
import functools

import jax
import jax.numpy as jnp
from jax.experimental import pallas as pl
from jax.experimental.pallas import tpu as pltpu

# Keep XLA reference matmuls at full f32 precision so the in-script numeric
# comparison against the Pallas kernel (which accumulates in f32) is tight.
jax.config.update("jax_default_matmul_precision", "highest")


# ----------------------------- tiling helpers -------------------------------


def _pick_tile(n, candidates):
    """Largest candidate that evenly divides n, else n itself (full dim)."""
    for c in candidates:
        if n >= c and n % c == 0:
            return c
    return n


def _gelu_exact(x):
    # nn.GELU() default: 0.5 * x * (1 + erf(x / sqrt(2)))  (exact erf GELU).
    return 0.5 * x * (1.0 + jax.lax.erf(x * 0.7071067811865476))


# ------------------------------ Pallas kernel --------------------------------


def _moe_expert_kernel(counts_ref, x_ref, wcat_ref, w1_ref, coef_ref,
                       out_ref, acc_ref, *, tf):
    # grid = (token tile ti [parallel], expert e [arbitrary], ffn chunk fi [arbitrary])
    ti = pl.program_id(0)
    e = pl.program_id(1)
    fi = pl.program_id(2)
    n_e = pl.num_programs(1)
    n_f = pl.num_programs(2)

    # Zero the f32 accumulator at the start of each token tile.
    @pl.when(jnp.logical_and(e == 0, fi == 0))
    def _():
        acc_ref[...] = jnp.zeros_like(acc_ref)

    # Skip experts that received no tokens in this tile (avoids wasted MXU work
    # and 0 * NaN leakage; coefficients are 0 for unselected tokens anyway).
    @pl.when(counts_ref[ti, e] > 0)
    def _():
        x = x_ref[...]                       # (tm, H)    resident across e, fi
        wcat = wcat_ref[...]                 # (H, 2*tf) = [W_chunk | Wv_chunk]

        # One MXU pass produces both the gated (h) and linear (v) halves.
        hv = jnp.dot(x, wcat, preferred_element_type=jnp.float32)   # (tm, 2*tf)
        h = _gelu_exact(hv[:, :tf])
        v = hv[:, tf:]
        ff = h * v                                                   # (tm, tf) f32

        # Routing coefficient for this expert: select column e of the resident
        # (tm, E) coef block via iota/select + lane reduce -> (tm, 1).
        lane = jax.lax.broadcasted_iota(jnp.int32, coef_ref.shape, 1)
        c = jnp.sum(
            jnp.where(lane == e, coef_ref[...].astype(jnp.float32), 0.0),
            axis=1, keepdims=True)                                   # (tm, 1)

        y = jnp.dot(ff.astype(w1_ref.dtype), w1_ref[...],
                    preferred_element_type=jnp.float32)              # (tm, H)
        acc_ref[...] += y * c

    # Write out (single cast + lane-dense store per token tile) at the last step.
    @pl.when(jnp.logical_and(e == n_e - 1, fi == n_f - 1))
    def _():
        out_ref[...] = acc_ref[...].astype(out_ref.dtype)


# ------------------------------ JAX wrapper ----------------------------------


@functools.partial(jax.jit, static_argnames=("top_k",))
def moe_block_forward(hidden_states, gate_w, lin_w, linv_w, lin1_w, top_k):
    """MoeBlock.forward.

    hidden_states: (B, S, H)
    gate_w : (H, E)
    lin_w  : (E, H, F)   expert `linear`   (pre-transposed)
    linv_w : (E, H, F)   expert `linear_v` (pre-transposed)
    lin1_w : (E, F, H)   expert `linear_1` (pre-transposed)
    Returns (final_hidden_states (B, S, H), router_logits (B*S, E)).
    """
    B, S, H = hidden_states.shape
    E = gate_w.shape[1]
    F = lin_w.shape[2]
    T = B * S
    x = hidden_states.reshape(T, H)

    # ---- router (gate): plain XLA matmul in f32 (output last dim E << 128 --
    # a Pallas kernel here would be pure launch/pipeline overhead; XLA fuses it
    # with the softmax).  Logits kept in f32 for softmax/top-k fidelity.
    router_logits_f32 = jnp.dot(x.astype(jnp.float32), gate_w.astype(jnp.float32),
                                preferred_element_type=jnp.float32)
    routing_weights = jax.nn.softmax(router_logits_f32, axis=1)
    # TODO(synk): top-k selection has no clean Pallas equivalent; done in JAX.
    topk_weights, selected_experts = jax.lax.top_k(routing_weights, top_k)
    topk_weights = topk_weights.astype(x.dtype)      # NO renorm (Grok-1 semantics)
    router_logits = router_logits_f32.astype(x.dtype)

    # Dense per-token coefficient table coef[t, e] (0 for unselected experts).
    one_hot = jax.nn.one_hot(selected_experts, E, dtype=jnp.float32)     # (T, k, E)
    coef = jnp.sum(one_hot * topk_weights[..., None].astype(jnp.float32),
                   axis=1)                                               # (T, E) f32

    # ---- tile sizes (full dims at toy shapes; MXU-aligned at real sizes).
    tm = _pick_tile(T, (512, 256, 128, 64, 32, 16, 8))   # token tile
    tf = _pick_tile(F, (512, 256, 128))                  # ffn-dim tile
    n_t = T // tm
    n_f = F // tf

    # Per-(token-tile, expert) routed-token counts -> SMEM scalar prefetch.
    sel_mask = jnp.sum(one_hot, axis=1)                                  # (T, E) 0/1
    counts = sel_mask.reshape(n_t, tm, E).sum(axis=1).astype(jnp.int32)  # (n_t, E)

    # Concatenate W and Wv chunk-wise so each (expert, chunk) first-layer weight
    # block is one contiguous (H, 2*tf) slab -> single MXU pass for h and v.
    wcat = jnp.concatenate(
        [lin_w.reshape(E, H, n_f, tf), linv_w.reshape(E, H, n_f, tf)], axis=-1)
    wcat = jnp.transpose(wcat, (0, 2, 1, 3))             # (E, n_f, H, 2*tf)
    w1r = lin1_w.reshape(E, n_f, tf, H)                  # (E, n_f, tf, H)

    # Conservative VMEM budget: double-buffered weight slabs + resident x/out/
    # coef blocks + f32 accumulator (clamped under v7x's 64 MiB physical VMEM).
    wbytes = jnp.dtype(lin_w.dtype).itemsize
    xbytes = jnp.dtype(x.dtype).itemsize
    vmem_est = (2 * (H * 2 * tf + tf * H) * wbytes
                + tm * H * (2 * xbytes + 4) + tm * E * 4)
    vmem_limit = int(min(max(2 * vmem_est, 16 * 1024 * 1024), 56 * 1024 * 1024))

    kernel = functools.partial(_moe_expert_kernel, tf=tf)

    final = pl.pallas_call(
        kernel,
        out_shape=jax.ShapeDtypeStruct((T, H), x.dtype),
        grid_spec=pltpu.PrefetchScalarGridSpec(
            num_scalar_prefetch=1,
            grid=(n_t, E, n_f),
            in_specs=[
                # x: resident per token tile across all (expert, chunk) steps.
                pl.BlockSpec((tm, H), lambda ti, e, fi, counts: (ti, 0)),
                # [W | Wv] slab for (expert e, chunk fi); leading dims squeezed.
                pl.BlockSpec((None, None, H, 2 * tf),
                             lambda ti, e, fi, counts: (e, fi, 0, 0)),
                # W1 chunk for (expert e, chunk fi).
                pl.BlockSpec((None, None, tf, H),
                             lambda ti, e, fi, counts: (e, fi, 0, 0)),
                # coef table: resident per token tile (no per-expert slivers).
                pl.BlockSpec((tm, E), lambda ti, e, fi, counts: (ti, 0)),
            ],
            out_specs=pl.BlockSpec((tm, H), lambda ti, e, fi, counts: (ti, 0)),
            scratch_shapes=[pltpu.VMEM((tm, H), jnp.float32)],   # f32 accumulator
        ),
        compiler_params=pltpu.CompilerParams(
            dimension_semantics=("parallel", "arbitrary", "arbitrary"),
            vmem_limit_bytes=vmem_limit,
        ),
    )(counts, x, wcat, w1r, coef)

    return final.reshape(B, S, H), router_logits


# ------------------------------ reference -----------------------------------


def moe_block_reference(hidden_states, gate_w, lin_w, linv_w, lin1_w, top_k):
    B, S, H = hidden_states.shape
    E = gate_w.shape[1]
    x = hidden_states.reshape(-1, H)
    logits = x @ gate_w
    rw = jax.nn.softmax(logits.astype(jnp.float32), axis=1)
    w, sel = jax.lax.top_k(rw, top_k)
    w = w.astype(x.dtype)
    out = jnp.zeros_like(x)
    for e in range(E):
        y = (_gelu_exact(x @ lin_w[e]) * (x @ linv_w[e])) @ lin1_w[e]
        coef = jnp.sum(jnp.where(sel == e, w, 0.0), axis=1, keepdims=True)
        out = out + y * coef
    return out.reshape(B, S, H), logits.astype(x.dtype)


def _run_case(key, batch, seq, hidden_dim, ffn_dim, num_experts, top_k,
              atol, rtol):
    kx, kg, k1, k2, k3 = jax.random.split(key, 5)
    hidden_states = jax.random.normal(kx, (batch, seq, hidden_dim), dtype=jnp.float32)
    gate_w = 0.1 * jax.random.normal(kg, (hidden_dim, num_experts), dtype=jnp.float32)
    lin_w = 0.1 * jax.random.normal(k1, (num_experts, hidden_dim, ffn_dim), dtype=jnp.float32)
    linv_w = 0.1 * jax.random.normal(k2, (num_experts, hidden_dim, ffn_dim), dtype=jnp.float32)
    lin1_w = 0.1 * jax.random.normal(k3, (num_experts, ffn_dim, hidden_dim), dtype=jnp.float32)

    final, router_logits = moe_block_forward(
        hidden_states, gate_w, lin_w, linv_w, lin1_w, top_k)
    jax.block_until_ready((final, router_logits))

    ref_final, ref_logits = moe_block_reference(
        hidden_states, gate_w, lin_w, linv_w, lin1_w, top_k)
    assert final.shape == (batch, seq, hidden_dim)
    assert router_logits.shape == (batch * seq, num_experts)
    assert jnp.allclose(final, ref_final, atol=atol, rtol=rtol), (
        float(jnp.max(jnp.abs(final - ref_final))))
    assert jnp.allclose(router_logits, ref_logits, atol=atol, rtol=rtol)


# --------------------------------- main --------------------------------------


if __name__ == "__main__":
    key = jax.random.PRNGKey(0)
    k_small, k_tiled = jax.random.split(key, 2)

    # Small shapes matching the module's toy configuration.
    _run_case(k_small, batch=2, seq=8, hidden_dim=32, ffn_dim=64,
              num_experts=4, top_k=2, atol=1e-5, rtol=1e-5)

    # Slightly larger MXU-aligned shapes to exercise token / ffn-chunk tiling
    # (n_t > 1, n_f > 1) and the multi-expert accumulator path.
    _run_case(k_tiled, batch=2, seq=512, hidden_dim=128, ffn_dim=1024,
              num_experts=8, top_k=2, atol=1e-3, rtol=1e-3)

    print("KERNEL_OK")
</pallas_src>

<mosaic_0001>
module attributes {stable_mosaic.version = 11 : i64} {
  func.func @_moe_expert_kernel(%arg0: i32, %arg1: i32, %arg2: i32, %arg3: memref<1x4xi32, #tpu.memory_space<smem>>, %arg4: memref<16x32xf32, #tpu.memory_space<vmem>>, %arg5: memref<1x1x32x128xf32, #tpu.memory_space<vmem>>, %arg6: memref<1x1x64x32xf32, #tpu.memory_space<vmem>>, %arg7: memref<16x4xf32, #tpu.memory_space<vmem>>, %arg8: memref<16x32xf32, #tpu.memory_space<vmem>>, %arg9: memref<16x32xf32, #tpu.memory_space<vmem>>) attributes {dimension_semantics = [#tpu.dimension_semantics<parallel>, #tpu.dimension_semantics<arbitrary>, #tpu.dimension_semantics<arbitrary>], iteration_bounds = array<i64: 1, 4, 1>, scalar_prefetch = 1 : i64, scratch_operands = 1 : i64, tpu.core_type = #tpu.core_type<tc>, window_params = [{transform_indices = @transform_0, window_bounds = array<i64: 16, 32>}, {transform_indices = @transform_1, window_bounds = array<i64: 1, 1, 32, 128>}, {transform_indices = @transform_2, window_bounds = array<i64: 1, 1, 64, 32>}, {transform_indices = @transform_3, window_bounds = array<i64: 16, 4>}, {transform_indices = @transform_4, window_bounds = array<i64: 16, 32>}]} {
    %c0_i32 = arith.constant 0 : i32
    %0 = arith.cmpi eq, %arg1, %c0_i32 : i32
    %c0_i32_0 = arith.constant 0 : i32
    %1 = arith.cmpi eq, %arg2, %c0_i32_0 : i32
    %2 = arith.andi %0, %1 : i1
    %3 = arith.extui %2 : i1 to i32
    %c0_i32_1 = arith.constant 0 : i32
    %4 = arith.cmpi ne, %3, %c0_i32_1 : i32
    scf.if %4 {
      %cst = arith.constant 0.000000e+00 : f32
      %16 = vector.broadcast %cst : f32 to vector<16x32xf32>
      %c0 = arith.constant 0 : index
      %c0_6 = arith.constant 0 : index
      %17 = vector.load %arg9[%c0, %c0_6] : memref<16x32xf32, #tpu.memory_space<vmem>>, vector<16x32xf32>
      tpu.vector_store %arg9[%c0, %c0_6], %16 {strides = array<i32>} : memref<16x32xf32, #tpu.memory_space<vmem>>, vector<16x32xf32>,
    } else {
    }
    %5 = arith.index_cast %arg0 : i32 to index
    %6 = arith.index_cast %arg1 : i32 to index
    %7 = memref.load %arg3[%5, %6] : memref<1x4xi32, #tpu.memory_space<smem>>
    %c0_i32_2 = arith.constant 0 : i32
    %8 = arith.cmpi sgt, %7, %c0_i32_2 : i32
    %9 = arith.extui %8 : i1 to i32
    %c0_i32_3 = arith.constant 0 : i32
    %10 = arith.cmpi ne, %9, %c0_i32_3 : i32
    scf.if %10 {
      %c0 = arith.constant 0 : index
      %c0_6 = arith.constant 0 : index
      %16 = vector.load %arg4[%c0, %c0_6] : memref<16x32xf32, #tpu.memory_space<vmem>>, vector<16x32xf32>
      %c0_7 = arith.constant 0 : index
      %c0_8 = arith.constant 0 : index
      %c0_9 = arith.constant 0 : index
      %c0_10 = arith.constant 0 : index
      %17 = vector.load %arg5[%c0_7, %c0_8, %c0_9, %c0_10] : memref<1x1x32x128xf32, #tpu.memory_space<vmem>>, vector<1x1x32x128xf32>
      %18 = vector.shape_cast %17 : vector<1x1x32x128xf32> to vector<32x128xf32>
      %cst = arith.constant dense<0.000000e+00> : vector<16x128xf32>
      %19 = tpu.matmul %16, %18, %cst {dimension_numbers = #tpu.dot_dimension_numbers<[1], [0], [0], [1], [0, 0, 1, 1], [], []>, precision = #tpu.contract_precision<fp32>} : vector<16x32xf32>, vector<32x128xf32>, vector<16x128xf32> -> vector<16x128xf32>
      %20 = vector.extract_strided_slice %19 {offsets = [0, 0], sizes = [16, 64], strides = [1, 1]} : vector<16x128xf32> to vector<16x64xf32>
      %cst_11 = arith.constant 5.000000e-01 : f32
      %21 = vector.broadcast %cst_11 : f32 to vector<16x64xf32>
      %22 = arith.mulf %21, %20 : vector<16x64xf32>
      %cst_12 = arith.constant 0.707106769 : f32
      %23 = vector.broadcast %cst_12 : f32 to vector<16x64xf32>
      %24 = arith.mulf %20, %23 : vector<16x64xf32>
      %25 = math.erf %24 : vector<16x64xf32>
      %cst_13 = arith.constant 1.000000e+00 : f32
      %26 = vector.broadcast %cst_13 : f32 to vector<16x64xf32>
      %27 = arith.addf %26, %25 : vector<16x64xf32>
      %28 = arith.mulf %22, %27 : vector<16x64xf32>
      %29 = vector.extract_strided_slice %19 {offsets = [0, 64], sizes = [16, 64], strides = [1, 1]} : vector<16x128xf32> to vector<16x64xf32>
      %30 = arith.mulf %28, %29 : vector<16x64xf32>
      %31 = tpu.iota {dimensions = array<i32: 1>} : vector<16x4xi32>
      %32 = vector.broadcast %arg1 : i32 to vector<16x4xi32>
      %33 = arith.cmpi eq, %31, %32 : vector<16x4xi32>
      %c0_14 = arith.constant 0 : index
      %c0_15 = arith.constant 0 : index
      %34 = vector.load %arg7[%c0_14, %c0_15] : memref<16x4xf32, #tpu.memory_space<vmem>>, vector<16x4xf32>
      %cst_16 = arith.constant 0.000000e+00 : f32
      %35 = vector.broadcast %cst_16 : f32 to vector<16x4xf32>
      %36 = arith.select %33, %34, %35 : vector<16x4xi1>, vector<16x4xf32>
      %cst_17 = arith.constant dense<0.000000e+00> : vector<16xf32>
      %37 = vector.multi_reduction <add>, %36, %cst_17 [1] : vector<16x4xf32> to vector<16xf32>
      %38 = vector.shape_cast %37 : vector<16xf32> to vector<16x1xf32>
      %c0_18 = arith.constant 0 : index
      %c0_19 = arith.constant 0 : index
      %c0_20 = arith.constant 0 : index
      %c0_21 = arith.constant 0 : index
      %39 = vector.load %arg6[%c0_18, %c0_19, %c0_20, %c0_21] : memref<1x1x64x32xf32, #tpu.memory_space<vmem>>, vector<1x1x64x32xf32>
      %40 = vector.shape_cast %39 : vector<1x1x64x32xf32> to vector<64x32xf32>
      %cst_22 = arith.constant dense<0.000000e+00> : vector<16x32xf32>
      %41 = tpu.matmul %30, %40, %cst_22 {dimension_numbers = #tpu.dot_dimension_numbers<[1], [0], [0], [1], [0, 0, 1, 1], [], []>, precision = #tpu.contract_precision<fp32>} : vector<16x64xf32>, vector<64x32xf32>, vector<16x32xf32> -> vector<16x32xf32>
      %c0_23 = arith.constant 0 : index
      %c0_24 = arith.constant 0 : index
      %42 = vector.load %arg9[%c0_23, %c0_24] : memref<16x32xf32, #tpu.memory_space<vmem>>, vector<16x32xf32>
      %43 = vector.broadcast %38 : vector<16x1xf32> to vector<16x32xf32>
      %44 = arith.mulf %41, %43 : vector<16x32xf32>
      %45 = arith.addf %42, %44 : vector<16x32xf32>
      %c0_25 = arith.constant 0 : index
      %c0_26 = arith.constant 0 : index
      %46 = vector.load %arg9[%c0_25, %c0_26] : memref<16x32xf32, #tpu.memory_space<vmem>>, vector<16x32xf32>
      tpu.vector_store %arg9[%c0_25, %c0_26], %45 {strides = array<i32>} : memref<16x32xf32, #tpu.memory_space<vmem>>, vector<16x32xf32>,
    } else {
    }
    %c3_i32 = arith.constant 3 : i32
    %11 = arith.cmpi eq, %arg1, %c3_i32 : i32
    %c0_i32_4 = arith.constant 0 : i32
    %12 = arith.cmpi eq, %arg2, %c0_i32_4 : i32
    %13 = arith.andi %11, %12 : i1
    %14 = arith.extui %13 : i1 to i32
    %c0_i32_5 = arith.constant 0 : i32
    %15 = arith.cmpi ne, %14, %c0_i32_5 : i32
    scf.if %15 {
      %c0 = arith.constant 0 : index
      %c0_6 = arith.constant 0 : index
      %16 = vector.load %arg9[%c0, %c0_6] : memref<16x32xf32, #tpu.memory_space<vmem>>, vector<16x32xf32>
      %c0_7 = arith.constant 0 : index
      %c0_8 = arith.constant 0 : index
      %17 = vector.load %arg8[%c0_7, %c0_8] : memref<16x32xf32, #tpu.memory_space<vmem>>, vector<16x32xf32>
      tpu.vector_store %arg8[%c0_7, %c0_8], %16 {strides = array<i32>} : memref<16x32xf32, #tpu.memory_space<vmem>>, vector<16x32xf32>,
    } else {
    }
    return
  }
  func.func @transform_0(%arg0: i32, %arg1: i32, %arg2: i32, %arg3: memref<1x4xi32, #tpu.memory_space<smem>>) -> (i32, i32) {
    %c0_i32 = arith.constant 0 : i32
    %c0_i32_0 = arith.constant 0 : i32
    return %arg0, %c0_i32 : i32, i32
  }
  func.func @transform_1(%arg0: i32, %arg1: i32, %arg2: i32, %arg3: memref<1x4xi32, #tpu.memory_space<smem>>) -> (i32, i32, i32, i32) {
    %c0_i32 = arith.constant 0 : i32
    %c0_i32_0 = arith.constant 0 : i32
    %c0_i32_1 = arith.constant 0 : i32
    return %arg1, %arg2, %c0_i32, %c0_i32_0 : i32, i32, i32, i32
  }
  func.func @transform_2(%arg0: i32, %arg1: i32, %arg2: i32, %arg3: memref<1x4xi32, #tpu.memory_space<smem>>) -> (i32, i32, i32, i32) {
    %c0_i32 = arith.constant 0 : i32
    %c0_i32_0 = arith.constant 0 : i32
    %c0_i32_1 = arith.constant 0 : i32
    return %arg1, %arg2, %c0_i32, %c0_i32_0 : i32, i32, i32, i32
  }
  func.func @transform_3(%arg0: i32, %arg1: i32, %arg2: i32, %arg3: memref<1x4xi32, #tpu.memory_space<smem>>) -> (i32, i32) {
    %c0_i32 = arith.constant 0 : i32
    %c0_i32_0 = arith.constant 0 : i32
    return %arg0, %c0_i32 : i32, i32
  }
  func.func @transform_4(%arg0: i32, %arg1: i32, %arg2: i32, %arg3: memref<1x4xi32, #tpu.memory_space<smem>>) -> (i32, i32) {
    %c0_i32 = arith.constant 0 : i32
    %c0_i32_0 = arith.constant 0 : i32
    return %arg0, %c0_i32 : i32, i32
  }
}

</mosaic_0001>

<llo_original>
// kernel: moe_block_forward.1
$region0: #{moe_block_forward.1}
  #allocation0 [shape = 'u32[]', space=smem, size = 0x4, offset = 0x4, fixed_abs, tag = 'smem constant byte address 0x4 - core index']
  #allocation1 [shape = 'u32[72,128]{1,0:T(1,128)}', space=vmem, size = 0x9000, scoped, tag = 'internal scratch']
  #allocation2 [shape = 'f32[16,32]{1,0:T(8,128)}', space=vmem, size = 0x2000, scoped, tag = 'scratch operand']
  #allocation3 [shape = 's32[1]{0}', space=sflag, size = 0x4, scoped, tag = 'scoped memory for moe_block_forward.1']
  #allocation4 [shape = 'u8[512]{0}', space=smem, size = 0x200, scoped, tag = 'prefetched SMEM operand 0']
  %s0 = inlined_call_operand.vmem [shape: s32[1,4], index: 0, kind: input, shape index: {}]
  %s1 = inlined_call_operand.vmem [shape: f32[16,32], index: 1, kind: input, shape index: {}]
  %s2 = inlined_call_operand.vmem [shape: f32[4,1,32,128], index: 2, kind: input, shape index: {}]
  %s3 = inlined_call_operand.vmem [shape: f32[4,1,64,32], index: 3, kind: input, shape index: {}]
  %s4 = inlined_call_operand.vmem [shape: f32[16,4], index: 4, kind: input, shape index: {}]
  %s5 = inlined_call_operand.hbm [shape: f32[16,32], index: 5, kind: output, shape index: {}]
  %s6 = sld [smem:[#allocation0]]
  $region61: #{moe_block_forward.1} parent=0
    _
  %s8 = ssub.s32 1, %s6
  %s9 = scalar_select 0, %s8, %s6
  %s11 = sshll.u32 %s0, 4
  %s12 = int_to_ptr.vmem [resolvable:$true] %s11
  %14 = dma.vmem_to_smem %s12, 16, [#allocation4], [#allocation3]
  %16 = dma.done [#allocation3], 16
  %17 = sfence
  $region1: #{moe_block_forward.1} parent=0
    #allocation5 [shape = 'u8[8192]{0}', space=vmem, size = 0x2000, scoped, tag = 'output window, operand 0, single buffered']
    #allocation6 [shape = 's32[2]{0}', space=sflag, size = 0x8, scoped, tag = 'scoped memory for moe_block_forward.1']
    %18 = vsyncpa [#allocation6], 0
    loop: start=0, step=1, limit=6
    $region2: #{moe_block_forward.1} parent=1 // loop_pre_header
      _
    $region3: #{moe_block_forward.1} parent=1 // loop_header
      %s20 = sphi 0, %s24
      %p21 = scmp.ge.s32.totalorder %s20, 6
      %s27 = sphi 0, %s46
      %s28 = sphi 0, %s42
      %s29 = sphi 0, %s38
      %s30 = sphi 0, %s27
      %s31 = sphi 0, %s28
      %s32 = sphi 0, %s29
      %s33 = sphi 0, %s30
      %s34 = sphi 0, %s31
      %s35 = sphi 0, %s32
      %s49 = sphi 0, %s51
      %s52 = sphi 0, %s49
      %s53 = sphi 0, %s52
      %s69 = sphi 0, %s53
      %s77 = sphi 0, %s79
      %s80 = sphi 0, %s77
      %s81 = sphi 0, %s80
      %s97 = sphi 0, %s81
      %s105 = sphi 0, %s107
      %s108 = sphi 0, %s105
      %s109 = sphi 0, %s108
      %s125 = sphi 0, %s109
      %s131 = sphi 0, %s133
      %s134 = sphi 0, %s131
      %s135 = sphi 0, %s134
      %s151 = sphi 0, %s135
      %s157 = sphi 0, %s159
      %s160 = sphi 0, %s157
      %s161 = sphi 0, %s160
      %s177 = sphi 0, %s161
    $region4: #{moe_block_forward.1} parent=1 // loop_header_branch
      %23 = sbr.rel (%p21) target = $region8
    $region5: #{moe_block_forward.1} parent=1 // loop_body
      %s25 = ssub.s32 %s20, 1
      %s26 = ssub.s32 %s20, 2
      %s36 = sadd.s32 1, %s29
      %p37 = scmp.ge.s32.totalorder %s36, 1
      %s38 = scalar_select %p37, 0, %s36
      %s39 = sadd.s32 1, %s28
      %s40 = scalar_select %p37, %s39, %s28
      %p41 = scmp.ge.s32.totalorder %s40, 4
      %s42 = scalar_select %p41, 0, %s40
      %s43 = sadd.s32 1, %s27
      %s44 = scalar_select %p41, %s43, %s27
      %p45 = scmp.ge.s32.totalorder %s44, 1
      %s46 = scalar_select %p45, 0, %s44
      %s47 = ssub.s32 %s27, %s46
      %p48 = scmp.eq.s32.totalorder %s47, 0
      %s50 = sadd.s32 %s49, 1
      %s51 = scalar_select %p48, %s49, %s50
      %p54 = pneg %p48
      %p55 = scmp.eq.s32.totalorder %s20, 3
      %p56 = por %p54, %p55
      %p57 = scmp.ne.s32.totalorder %s49, %s52
      %p58 = scmp.eq.s32.totalorder %s20, 0
      %p59 = por %p57, %p58
      %p60 = scmp.ne.s32.totalorder %s49, %s52
      %p61 = scmp.eq.s32.totalorder %s25, 3
      %p62 = por %p60, %p61
      %p63 = scmp.ne.s32.totalorder %s52, %s53
      %p64 = scmp.eq.s32.totalorder %s25, 0
      %p65 = por %p63, %p64
      %p66 = scmp.ne.s32.totalorder %s52, %s53
      %p67 = scmp.eq.s32.totalorder %s26, 3
      %p68 = por %p66, %p67
      %p70 = scmp.ne.s32.totalorder %s53, %s69
      %p71 = scmp.eq.s32.totalorder %s26, 0
      %p72 = por %p70, %p71
      %s73 = ssub.s32 %s28, %s42
      %s74 = ssub.s32 %s29, %s38
      %s75 = sor.u32 %s73, %s74
      %p76 = scmp.eq.s32.totalorder %s75, 0
      %s78 = sadd.s32 %s77, 1
      %s79 = scalar_select %p76, %s77, %s78
      %p82 = pneg %p76
      %p83 = scmp.eq.s32.totalorder %s20, 3
      %p84 = por %p82, %p83
      %p85 = scmp.ne.s32.totalorder %s77, %s80
      %p86 = scmp.eq.s32.totalorder %s20, 0
      %p87 = por %p85, %p86
      %p88 = scmp.ne.s32.totalorder %s77, %s80
      %p89 = scmp.eq.s32.totalorder %s25, 3
      %p90 = por %p88, %p89
      %p91 = scmp.ne.s32.totalorder %s80, %s81
      %p92 = scmp.eq.s32.totalorder %s25, 0
      %p93 = por %p91, %p92
      %p94 = scmp.ne.s32.totalorder %s80, %s81
      %p95 = scmp.eq.s32.totalorder %s26, 3
      %p96 = por %p94, %p95
      %p98 = scmp.ne.s32.totalorder %s81, %s97
      %p99 = scmp.eq.s32.totalorder %s26, 0
      %p100 = por %p98, %p99
      %s101 = ssub.s32 %s28, %s42
      %s102 = ssub.s32 %s29, %s38
      %s103 = sor.u32 %s101, %s102
      %p104 = scmp.eq.s32.totalorder %s103, 0
      %s106 = sadd.s32 %s105, 1
      %s107 = scalar_select %p104, %s105, %s106
      %p110 = pneg %p104
      %p111 = scmp.eq.s32.totalorder %s20, 3
      %p112 = por %p110, %p111
      %p113 = scmp.ne.s32.totalorder %s105, %s108
      %p114 = scmp.eq.s32.totalorder %s20, 0
      %p115 = por %p113, %p114
      %p116 = scmp.ne.s32.totalorder %s105, %s108
      %p117 = scmp.eq.s32.totalorder %s25, 3
      %p118 = por %p116, %p117
      %p119 = scmp.ne.s32.totalorder %s108, %s109
      %p120 = scmp.eq.s32.totalorder %s25, 0
      %p121 = por %p119, %p120
      %p122 = scmp.ne.s32.totalorder %s108, %s109
      %p123 = scmp.eq.s32.totalorder %s26, 3
      %p124 = por %p122, %p123
      %p126 = scmp.ne.s32.totalorder %s109, %s125
      %p127 = scmp.eq.s32.totalorder %s26, 0
      %p128 = por %p126, %p127
      %s129 = ssub.s32 %s27, %s46
      %p130 = scmp.eq.s32.totalorder %s129, 0
      %s132 = sadd.s32 %s131, 1
      %s133 = scalar_select %p130, %s131, %s132
      %p136 = pneg %p130
      %p137 = scmp.eq.s32.totalorder %s20, 3
      %p138 = por %p136, %p137
      %p139 = scmp.ne.s32.totalorder %s131, %s134
      %p140 = scmp.eq.s32.totalorder %s20, 0
      %p141 = por %p139, %p140
      %p142 = scmp.ne.s32.totalorder %s131, %s134
      %p143 = scmp.eq.s32.totalorder %s25, 3
      %p144 = por %p142, %p143
      %p145 = scmp.ne.s32.totalorder %s134, %s135
      %p146 = scmp.eq.s32.totalorder %s25, 0
      %p147 = por %p145, %p146
      %p148 = scmp.ne.s32.totalorder %s134, %s135
      %p149 = scmp.eq.s32.totalorder %s26, 3
      %p150 = por %p148, %p149
      %p152 = scmp.ne.s32.totalorder %s135, %s151
      %p153 = scmp.eq.s32.totalorder %s26, 0
      %p154 = por %p152, %p153
      %s155 = ssub.s32 %s27, %s46
      %p156 = scmp.eq.s32.totalorder %s155, 0
      %s158 = sadd.s32 %s157, 1
      %s159 = scalar_select %p156, %s157, %s158
      %p162 = pneg %p156
      %p163 = scmp.eq.s32.totalorder %s20, 3
      %p164 = por %p162, %p163
      %p165 = scmp.ne.s32.totalorder %s157, %s160
      %p166 = scmp.eq.s32.totalorder %s20, 0
      %p167 = por %p165, %p166
      %p168 = scmp.ne.s32.totalorder %s157, %s160
      %p169 = scmp.eq.s32.totalorder %s25, 3
      %p170 = por %p168, %p169
      %p171 = scmp.ne.s32.totalorder %s160, %s161
      %p172 = scmp.eq.s32.totalorder %s25, 0
      %p173 = por %p171, %p172
      %p174 = scmp.ne.s32.totalorder %s160, %s161
      %p175 = scmp.eq.s32.totalorder %s26, 3
      %p176 = por %p174, %p175
      %p178 = scmp.ne.s32.totalorder %s161, %s177
      %p179 = scmp.eq.s32.totalorder %s26, 0
      %p180 = por %p178, %p179
      %p181 = scmp.le.s32.totalorder 1, %s20
      %p182 = scmp.lt.s32.totalorder %s20, 5
      %p183 = pnand %p181, %p182
      %p184 = pneg %p183
      // Predicated region
      $region9: #{moe_block_forward.1} parent=5 // pred_check
        _
      $region10: #{moe_block_forward.1} parent=5 // pred_check_branch
        %186 = sbr.rel (%p183) target = $region12
      $region11: #{moe_block_forward.1} parent=5 // pred_region
        %s187 = ssub.s32 %s20, 1
        // Predicated region
        $region13: #{moe_block_forward.1} parent=11 // pred_check
          %p188 = pneg %p65
        $region14: #{moe_block_forward.1} parent=11 // pred_check_branch
          %190 = sbr.rel (%p188) target = $region16
        $region15: #{moe_block_forward.1} parent=11 // pred_region
          %s191 = smul.u32 2, %s30
          %p192 = scmp.lt.s32.totalorder %s191, 1
          %s193 = scalar_select %p192, %s191, 1
          %s194 = smul.addr %s193, 8
          %s195 = scalar_lea.vmem %s1, %s194
          %s196 = smul.u32 2, %s30
        $region16: #{moe_block_forward.1} parent=11 // pred_fallthru
          _
        // Predicated region
        $region17: #{moe_block_forward.1} parent=11 // pred_check
          %p197 = pneg %p147
        $region18: #{moe_block_forward.1} parent=11 // pred_check_branch
          %199 = sbr.rel (%p197) target = $region20
        $region19: #{moe_block_forward.1} parent=11 // pred_region
          %s200 = smul.u32 2, %s30
          %p201 = scmp.lt.s32.totalorder %s200, 1
          %s202 = scalar_select %p201, %s200, 1
          %s203 = smul.addr %s202, 8
          %s204 = scalar_lea.vmem %s4, %s203
          %s205 = smul.u32 2, %s30
        $region20: #{moe_block_forward.1} parent=11 // pred_fallthru
          _
      $region12: #{moe_block_forward.1} parent=5 // pred_fallthru
        _
      %p206 = scmp.lt.s32.totalorder %s20, 4
      // Predicated region
      $region21: #{moe_block_forward.1} parent=5 // pred_check
        %p207 = pneg %p206
      $region22: #{moe_block_forward.1} parent=5 // pred_check_branch
        %209 = sbr.rel (%p207) target = $region24
      $region23: #{moe_block_forward.1} parent=5 // pred_region
        // Predicated region
        $region25: #{moe_block_forward.1} parent=23 // pred_check
          %p210 = pneg %p87
        $region26: #{moe_block_forward.1} parent=23 // pred_check_branch
          %212 = sbr.rel (%p210) target = $region28
        $region27: #{moe_block_forward.1} parent=23 // pred_region
          %p213 = scmp.lt.s32.totalorder %s28, 3
          %s214 = scalar_select %p213, %s28, 3
          %p215 = scmp.lt.s32.totalorder %s29, 0
          %s216 = scalar_select %p215, %s29, 0
          %s217 = smul.addr %s216, 4
          %s218 = smul.addr %s214, 4
          %s219 = sadd.s32 %s217, %s218
          %s220 = smul.addr %s219, 8
          %s221 = scalar_lea.vmem %s2, %s220
        $region28: #{moe_block_forward.1} parent=23 // pred_fallthru
          _
        // Predicated region
        $region29: #{moe_block_forward.1} parent=23 // pred_check
          %p222 = pneg %p115
        $region30: #{moe_block_forward.1} parent=23 // pred_check_branch
          %224 = sbr.rel (%p222) target = $region32
        $region31: #{moe_block_forward.1} parent=23 // pred_region
          %p225 = scmp.lt.s32.totalorder %s28, 3
          %s226 = scalar_select %p225, %s28, 3
          %p227 = scmp.lt.s32.totalorder %s29, 0
          %s228 = scalar_select %p227, %s29, 0
          %s229 = smul.addr %s228, 8
          %s230 = smul.addr %s226, 8
          %s231 = sadd.s32 %s229, %s230
          %s232 = smul.addr %s231, 8
          %s233 = scalar_lea.vmem %s3, %s232
        $region32: #{moe_block_forward.1} parent=23 // pred_fallthru
          _
      $region24: #{moe_block_forward.1} parent=5 // pred_fallthru
        _
      %p234 = scmp.le.s32.totalorder 1, %s20
      %p235 = scmp.lt.s32.totalorder %s20, 5
      %p236 = pnand %p234, %p235
      %p237 = pneg %p236
      // Predicated region
      $region33: #{moe_block_forward.1} parent=5 // pred_check
        _
      $region34: #{moe_block_forward.1} parent=5 // pred_check_branch
        %239 = sbr.rel (%p236) target = $region36
      $region35: #{moe_block_forward.1} parent=5 // pred_region
        %s240 = ssub.s32 %s20, 1
        %s241 = smul.u32 2, %s30
        %p242 = scmp.lt.s32.totalorder %s241, 1
        %s243 = scalar_select %p242, %s241, 1
        %s244 = smul.addr %s243, 8
        %s245 = scalar_lea.vmem %s1, %s244
        %p246 = pneg %p65
        %p247 = pneg %p62
        %p248 = scmp.lt.s32.totalorder %s31, 3
        %s249 = scalar_select %p248, %s31, 3
        %p250 = scmp.lt.s32.totalorder %s32, 0
        %s251 = scalar_select %p250, %s32, 0
        %s252 = smul.addr %s251, 4
        %s253 = smul.addr %s249, 4
        %s254 = sadd.s32 %s252, %s253
        %s255 = smul.addr %s254, 8
        %s256 = scalar_lea.vmem %s2, %s255
        %p257 = pneg %p93
        %p258 = pneg %p90
        %p259 = scmp.lt.s32.totalorder %s31, 3
        %s260 = scalar_select %p259, %s31, 3
        %p261 = scmp.lt.s32.totalorder %s32, 0
        %s262 = scalar_select %p261, %s32, 0
        %s263 = smul.addr %s262, 8
        %s264 = smul.addr %s260, 8
        %s265 = sadd.s32 %s263, %s264
        %s266 = smul.addr %s265, 8
        %s267 = scalar_lea.vmem %s3, %s266
        %p268 = pneg %p121
        %p269 = pneg %p118
        %s270 = smul.u32 2, %s30
        %p271 = scmp.lt.s32.totalorder %s270, 1
        %s272 = scalar_select %p271, %s270, 1
        %s273 = smul.addr %s272, 8
        %s274 = scalar_lea.vmem %s4, %s273
        %p275 = pneg %p147
        %p276 = pneg %p144
        %p277 = pneg %p173
        %p278 = pneg %p170
        %s279 = smul.u32 2, %s30
        %p280 = scmp.lt.s32.totalorder %s279, 1
        %s281 = scalar_select %p280, %s279, 1
        %s282 = smul.addr %s281, 8
        %s283 = scalar_lea.vmem %s1, %s282
        %s284 = smul.u32 2, %s30
        %p285 = scmp.lt.s32.totalorder %s31, 3
        %s286 = scalar_select %p285, %s31, 3
        %p287 = scmp.lt.s32.totalorder %s32, 0
        %s288 = scalar_select %p287, %s32, 0
        %s289 = smul.addr %s288, 4
        %s290 = smul.addr %s286, 4
        %s291 = sadd.s32 %s289, %s290
        %s292 = smul.addr %s291, 8
        %s293 = scalar_lea.vmem %s2, %s292
        %p294 = scmp.lt.s32.totalorder %s31, 3
        %s295 = scalar_select %p294, %s31, 3
        %p296 = scmp.lt.s32.totalorder %s32, 0
        %s297 = scalar_select %p296, %s32, 0
        %s298 = smul.addr %s297, 8
        %s299 = smul.addr %s295, 8
        %s300 = sadd.s32 %s298, %s299
        %s301 = smul.addr %s300, 8
        %s302 = scalar_lea.vmem %s3, %s301
        %s303 = smul.u32 2, %s30
        %p304 = scmp.lt.s32.totalorder %s303, 1
        %s305 = scalar_select %p304, %s303, 1
        %s306 = smul.addr %s305, 8
        %s307 = scalar_lea.vmem %s4, %s306
        %s308 = smul.u32 2, %s30
        %s309 = smul.u32 2, %s30
        %p310 = scmp.eq.s32.totalorder %s31, 0
        %p311 = scmp.eq.s32.totalorder %s32, 0
        %p312 = pnand %p310, %p311
        %p313 = pneg %p312
        // Predicated region
        $region37: #{moe_block_forward.1} parent=35 // pred_check
          _
        $region38: #{moe_block_forward.1} parent=35 // pred_check_branch
          %315 = sbr.rel (%p312) target = $region40
        $region39: #{moe_block_forward.1} parent=35 // pred_region
          %vm316 = vcmask 261120
          %317 = vst.msk [vmem:[#allocation2] sm:$0xff] %vm316, 0.0
          %318 = vst.msk [vmem:[#allocation2 + $0x8] sm:$0xff] %vm316, 0.0
        $region40: #{moe_block_forward.1} parent=35 // pred_fallthru
          _
        %s319 = sshra.s32 %s31, 7
        %s320 = sand.u32 %s31, 127
        %s321 = sadd.s32 %s319, %s30
        %s322 = smul.u32 %s321, 128
        %s323 = sshra.s32 %s31, 7
        %s324 = sand.u32 %s31, 127
        %s325 = sadd.s32 %s322, %s324
        %s326 = sld [smem:[#allocation4 + %s325]]
        %p327 = scmp.gt.s32.totalorder %s326, 0
        // Predicated region
        $region41: #{moe_block_forward.1} parent=35 // pred_check
          %p328 = pneg %p327
        $region42: #{moe_block_forward.1} parent=35 // pred_check_branch
          %330 = sbr.rel (%p328) target = $region44
        $region43: #{moe_block_forward.1} parent=35 // pred_region
          %v331 = vld [vmem:[%s283] sm:$0xff]
          %v332 = vld [vmem:[%s283 + $0x8] sm:$0xff]
          %v333 = vld [vmem:[%s293] sm:$0xff]
          %v334 = vld [vmem:[%s293 + $0x8] sm:$0xff]
          %v335 = vld [vmem:[%s293 + $0x10] sm:$0xff]
          %v336 = vld [vmem:[%s293 + $0x18] sm:$0xff]
          %vm337 = vcmask 261120
          %v339 = vsel %vm337, %v331, 0
          %v342 = vsel %vm337, %v332, 0
          %344 = vmatpush.msra.mxu0 0.0
          %345 = vmatpush.msra.mxu0 0.0
          %346 = vmatpush.msra.mxu0 0.0
          %347 = vmatpush.msra.mxu0 0.0
          %348 = vmatpush.msra.mxu0 0.0
          %349 = vmatpush.msra.mxu0 0.0
          %350 = vmatpush.msra.mxu0 0.0
          %351 = vmatpush.msra.mxu0 0.0
          %352 = vmatpush.msra.mxu0 0.0
          %353 = vmatpush.msra.mxu0 0.0
          %354 = vmatpush.msra.mxu0 0.0
          %355 = vmatpush.msra.mxu0 0.0
          %v356 = vand.u32 %v336, 4294901760
          %357 = vmatpush.msra.mxu0 %v356
          %v358 = vand.u32 %v335, 4294901760
          %359 = vmatpush.msra.mxu0 %v358
          %v360 = vand.u32 %v334, 4294901760
          %361 = vmatpush.msra.mxu0 %v360
          %v362 = vand.u32 %v333, 4294901760
          %363 = vmatpush.msra.mxu0 %v362
          %v364 = vand.u32 %v339, 4294901760
          %v365 = vsub.f32 %v339, %v364
          %v366 = vand.u32 %v365, 4294901760
          %v367 = vsub.f32 %v365, %v366
          %v368 = vand.u32 %v367, 4294901760
          %369 = vmatmul.f32.gmra.mxu0 %v368
          %v370 = vpop.f32.mrf.mxu0
          %v371 = vadd.f32 0.0, %v370
          %v372 = vand.u32 %v342, 4294901760
          %v373 = vsub.f32 %v342, %v372
          %v374 = vand.u32 %v373, 4294901760
          %v375 = vsub.f32 %v373, %v374
          %v376 = vand.u32 %v375, 4294901760
          %377 = vmatmul.f32.gmra.mxu0 %v376
          %v378 = vpop.f32.mrf.mxu0
          %v379 = vadd.f32 0.0, %v378
          %380 = vdwg.mxu0
          %381 = vmatpush.msra.mxu0 0.0
          %382 = vmatpush.msra.mxu0 0.0
          %383 = vmatpush.msra.mxu0 0.0
          %384 = vmatpush.msra.mxu0 0.0
          %385 = vmatpush.msra.mxu0 0.0
          %386 = vmatpush.msra.mxu0 0.0
          %387 = vmatpush.msra.mxu0 0.0
          %388 = vmatpush.msra.mxu0 0.0
          %389 = vmatpush.msra.mxu0 0.0
          %390 = vmatpush.msra.mxu0 0.0
          %391 = vmatpush.msra.mxu0 0.0
          %392 = vmatpush.msra.mxu0 0.0
          %v393 = vand.u32 %v336, 4294901760
          %v394 = vsub.f32 %v336, %v393
          %v395 = vand.u32 %v394, 4294901760
          %v396 = vsub.f32 %v394, %v395
          %v397 = vand.u32 %v396, 4294901760
          %398 = vmatpush.msra.mxu0 %v397
          %v399 = vand.u32 %v335, 4294901760
          %v400 = vsub.f32 %v335, %v399
          %v401 = vand.u32 %v400, 4294901760
          %v402 = vsub.f32 %v400, %v401
          %v403 = vand.u32 %v402, 4294901760
          %404 = vmatpush.msra.mxu0 %v403
          %v405 = vand.u32 %v334, 4294901760
          %v406 = vsub.f32 %v334, %v405
          %v407 = vand.u32 %v406, 4294901760
          %v408 = vsub.f32 %v406, %v407
          %v409 = vand.u32 %v408, 4294901760
          %410 = vmatpush.msra.mxu0 %v409
          %v411 = vand.u32 %v333, 4294901760
          %v412 = vsub.f32 %v333, %v411
          %v413 = vand.u32 %v412, 4294901760
          %v414 = vsub.f32 %v412, %v413
          %v415 = vand.u32 %v414, 4294901760
          %416 = vmatpush.msra.mxu0 %v415
          %v417 = vand.u32 %v339, 4294901760
          %418 = vmatmul.f32.gmra.mxu0 %v417
          %v419 = vpop.f32.mrf.mxu0
          %v420 = vadd.f32 %v371, %v419
          %v421 = vand.u32 %v342, 4294901760
          %422 = vmatmul.f32.gmra.mxu0 %v421
          %v423 = vpop.f32.mrf.mxu0
          %v424 = vadd.f32 %v379, %v423
          %425 = vdwg.mxu0
          %426 = vmatpush.msra.mxu0 0.0
          %427 = vmatpush.msra.mxu0 0.0
          %428 = vmatpush.msra.mxu0 0.0
          %429 = vmatpush.msra.mxu0 0.0
          %430 = vmatpush.msra.mxu0 0.0
          %431 = vmatpush.msra.mxu0 0.0
          %432 = vmatpush.msra.mxu0 0.0
          %433 = vmatpush.msra.mxu0 0.0
          %434 = vmatpush.msra.mxu0 0.0
          %435 = vmatpush.msra.mxu0 0.0
          %436 = vmatpush.msra.mxu0 0.0
          %437 = vmatpush.msra.mxu0 0.0
          %v438 = vand.u32 %v336, 4294901760
          %v439 = vsub.f32 %v336, %v438
          %440 = vmatpush.msra.mxu0 %v439
          %v441 = vand.u32 %v335, 4294901760
          %v442 = vsub.f32 %v335, %v441
          %443 = vmatpush.msra.mxu0 %v442
          %v444 = vand.u32 %v334, 4294901760
          %v445 = vsub.f32 %v334, %v444
          %446 = vmatpush.msra.mxu0 %v445
          %v447 = vand.u32 %v333, 4294901760
          %v448 = vsub.f32 %v333, %v447
          %449 = vmatpush.msra.mxu0 %v448
          %v450 = vand.u32 %v339, 4294901760
          %v451 = vsub.f32 %v339, %v450
          %452 = vmatmul.f32.gmra.mxu0 %v451
          %v453 = vpop.f32.mrf.mxu0
          %v454 = vadd.f32 %v420, %v453
          %v455 = vand.u32 %v342, 4294901760
          %v456 = vsub.f32 %v342, %v455
          %457 = vmatmul.f32.gmra.mxu0 %v456
          %v458 = vpop.f32.mrf.mxu0
          %v459 = vadd.f32 %v424, %v458
          %460 = vdwg.mxu0
          %461 = vmatpush.msra.mxu0 0.0
          %462 = vmatpush.msra.mxu0 0.0
          %463 = vmatpush.msra.mxu0 0.0
          %464 = vmatpush.msra.mxu0 0.0
          %465 = vmatpush.msra.mxu0 0.0
          %466 = vmatpush.msra.mxu0 0.0
          %467 = vmatpush.msra.mxu0 0.0
          %468 = vmatpush.msra.mxu0 0.0
          %469 = vmatpush.msra.mxu0 0.0
          %470 = vmatpush.msra.mxu0 0.0
          %471 = vmatpush.msra.mxu0 0.0
          %472 = vmatpush.msra.mxu0 0.0
          %v473 = vand.u32 %v336, 4294901760
          %474 = vmatpush.msra.mxu0 %v473
          %v475 = vand.u32 %v335, 4294901760
          %476 = vmatpush.msra.mxu0 %v475
          %v477 = vand.u32 %v334, 4294901760
          %478 = vmatpush.msra.mxu0 %v477
          %v479 = vand.u32 %v333, 4294901760
          %480 = vmatpush.msra.mxu0 %v479
          %v481 = vand.u32 %v339, 4294901760
          %v482 = vsub.f32 %v339, %v481
          %v483 = vand.u32 %v482, 4294901760
          %484 = vmatmul.f32.gmra.mxu0 %v483
          %v485 = vpop.f32.mrf.mxu0
          %v486 = vadd.f32 %v454, %v485
          %v487 = vand.u32 %v342, 4294901760
          %v488 = vsub.f32 %v342, %v487
          %v489 = vand.u32 %v488, 4294901760
          %490 = vmatmul.f32.gmra.mxu0 %v489
          %v491 = vpop.f32.mrf.mxu0
          %v492 = vadd.f32 %v459, %v491
          %493 = vdwg.mxu0
          %494 = vmatpush.msra.mxu0 0.0
          %495 = vmatpush.msra.mxu0 0.0
          %496 = vmatpush.msra.mxu0 0.0
          %497 = vmatpush.msra.mxu0 0.0
          %498 = vmatpush.msra.mxu0 0.0
          %499 = vmatpush.msra.mxu0 0.0
          %500 = vmatpush.msra.mxu0 0.0
          %501 = vmatpush.msra.mxu0 0.0
          %502 = vmatpush.msra.mxu0 0.0
          %503 = vmatpush.msra.mxu0 0.0
          %504 = vmatpush.msra.mxu0 0.0
          %505 = vmatpush.msra.mxu0 0.0
          %v506 = vand.u32 %v336, 4294901760
          %v507 = vsub.f32 %v336, %v506
          %v508 = vand.u32 %v507, 4294901760
          %509 = vmatpush.msra.mxu0 %v508
          %v510 = vand.u32 %v335, 4294901760
          %v511 = vsub.f32 %v335, %v510
          %v512 = vand.u32 %v511, 4294901760
          %513 = vmatpush.msra.mxu0 %v512
          %v514 = vand.u32 %v334, 4294901760
          %v515 = vsub.f32 %v334, %v514
          %v516 = vand.u32 %v515, 4294901760
          %517 = vmatpush.msra.mxu0 %v516
          %v518 = vand.u32 %v333, 4294901760
          %v519 = vsub.f32 %v333, %v518
          %v520 = vand.u32 %v519, 4294901760
          %521 = vmatpush.msra.mxu0 %v520
          %v522 = vand.u32 %v339, 4294901760
          %523 = vmatmul.f32.gmra.mxu0 %v522
          %v524 = vpop.f32.mrf.mxu0
          %v525 = vadd.f32 %v486, %v524
          %v526 = vand.u32 %v342, 4294901760
          %527 = vmatmul.f32.gmra.mxu0 %v526
          %v528 = vpop.f32.mrf.mxu0
          %v529 = vadd.f32 %v492, %v528
          %530 = vdwg.mxu0
          %531 = vmatpush.msra.mxu0 0.0
          %532 = vmatpush.msra.mxu0 0.0
          %533 = vmatpush.msra.mxu0 0.0
          %534 = vmatpush.msra.mxu0 0.0
          %535 = vmatpush.msra.mxu0 0.0
          %536 = vmatpush.msra.mxu0 0.0
          %537 = vmatpush.msra.mxu0 0.0
          %538 = vmatpush.msra.mxu0 0.0
          %539 = vmatpush.msra.mxu0 0.0
          %540 = vmatpush.msra.mxu0 0.0
          %541 = vmatpush.msra.mxu0 0.0
          %542 = vmatpush.msra.mxu0 0.0
          %v543 = vand.u32 %v336, 4294901760
          %544 = vmatpush.msra.mxu0 %v543
          %v545 = vand.u32 %v335, 4294901760
          %546 = vmatpush.msra.mxu0 %v545
          %v547 = vand.u32 %v334, 4294901760
          %548 = vmatpush.msra.mxu0 %v547
          %v549 = vand.u32 %v333, 4294901760
          %550 = vmatpush.msra.mxu0 %v549
          %v551 = vand.u32 %v339, 4294901760
          %552 = vmatmul.f32.gmra.mxu0 %v551
          %v553 = vpop.f32.mrf.mxu0
          %v554 = vadd.f32 %v525, %v553
          %v555 = vand.u32 %v342, 4294901760
          %556 = vmatmul.f32.gmra.mxu0 %v555
          %v557 = vpop.f32.mrf.mxu0
          %v558 = vadd.f32 %v529, %v557
          %559 = vdwg.mxu0
          %v560 = vmul.f32 %v554, 0.5
          %v561 = vmul.f32 %v558, 0.5
          %v562 = vmul.f32 %v554, 0.70710677
          %v563 = vmul.f32 %v558, 0.70710677
          %v564 = vmul.f32 %v562, %v562
          %v565 = vmin.f32 16.0, %v564
          %v566 = vmul.f32 %v565, 2.1237322e-06
          %v567 = vadd.f32 %v566, 0.00028619796
          %v568 = vmul.f32 %v565, %v567
          %v569 = vadd.f32 %v568, 0.0036580483
          %v570 = vmul.f32 %v565, %v569
          %v571 = vadd.f32 %v570, 0.05243302
          %v572 = vmul.f32 %v565, %v571
          %v573 = vadd.f32 %v572, 0.18741608
          %v574 = vmul.f32 %v565, %v573
          %v575 = vadd.f32 %v574, 1.1283791
          %v576 = vmul.f32 %v562, %v575
          %v577 = vmul.f32 %v565, 3.8918573e-05
          %v578 = vadd.f32 %v577, 0.001143296
          %v579 = vmul.f32 %v565, %v578
          %v580 = vadd.f32 %v579, 0.014752088
          %v581 = vmul.f32 %v565, %v580
          %v582 = vadd.f32 %v581, 0.112945676
          %v583 = vmul.f32 %v565, %v582
          %v584 = vadd.f32 %v583, 0.4994258
          %v585 = vmul.f32 %v565, %v584
          %v586 = vadd.f32 %v585, 1.0
          %v587 = vrcp.pop %v586
          %v588 = vmul.f32 %v586, %v587
          %v589 = vsub.f32 1.0, %v588
          %v590 = vmul.f32 %v587, %v589
          %v591 = vadd.f32 %v587, %v590
          %vm592 = vweird.f32 %v586
          %vm593 = vweird.f32 %v587
          %vm594 = vmor %vm592, %vm593
          %v595 = vsel %vm594, %v587, %v591
          %v596 = vand.u32 2147483647, %v586
          %vm597 = vcmp.eq.f32.partialorder %v596, 8.507059e+37
          %v598 = vand.u32 %v586, 2147483648
          %v599 = vor.u32 1.1754944e-38, %v598
          %v600 = vsel %vm597, %v599, %v595
          %v601 = vmul.f32 %v576, %v600
          %v602 = vmin.f32 %v601, 1.0
          %v603 = vmax.f32 %v602, -1.0
          %v604 = vmul.f32 %v563, %v563
          %v605 = vmin.f32 16.0, %v604
          %v606 = vmul.f32 %v605, 2.1237322e-06
          %v607 = vadd.f32 %v606, 0.00028619796
          %v608 = vmul.f32 %v605, %v607
          %v609 = vadd.f32 %v608, 0.0036580483
          %v610 = vmul.f32 %v605, %v609
          %v611 = vadd.f32 %v610, 0.05243302
          %v612 = vmul.f32 %v605, %v611
          %v613 = vadd.f32 %v612, 0.18741608
          %v614 = vmul.f32 %v605, %v613
          %v615 = vadd.f32 %v614, 1.1283791
          %v616 = vmul.f32 %v563, %v615
          %v617 = vmul.f32 %v605, 3.8918573e-05
          %v618 = vadd.f32 %v617, 0.001143296
          %v619 = vmul.f32 %v605, %v618
          %v620 = vadd.f32 %v619, 0.014752088
          %v621 = vmul.f32 %v605, %v620
          %v622 = vadd.f32 %v621, 0.112945676
          %v623 = vmul.f32 %v605, %v622
          %v624 = vadd.f32 %v623, 0.4994258
          %v625 = vmul.f32 %v605, %v624
          %v626 = vadd.f32 %v625, 1.0
          %v627 = vrcp.pop %v626
          %v628 = vmul.f32 %v626, %v627
          %v629 = vsub.f32 1.0, %v628
          %v630 = vmul.f32 %v627, %v629
          %v631 = vadd.f32 %v627, %v630
          %vm632 = vweird.f32 %v626
          %vm633 = vweird.f32 %v627
          %vm634 = vmor %vm632, %vm633
          %v635 = vsel %vm634, %v627, %v631
          %v636 = vand.u32 2147483647, %v626
          %vm637 = vcmp.eq.f32.partialorder %v636, 8.507059e+37
          %v638 = vand.u32 %v626, 2147483648
          %v639 = vor.u32 1.1754944e-38, %v638
          %v640 = vsel %vm637, %v639, %v635
          %v641 = vmul.f32 %v616, %v640
          %v642 = vmin.f32 %v641, 1.0
          %v643 = vmax.f32 %v642, -1.0
          %v644 = vadd.f32 %v603, 1.0
          %v645 = vadd.f32 %v643, 1.0
          %v646 = vmul.f32 %v560, %v644
          %v647 = vmul.f32 %v561, %v645
          %650 = vrot.lane.b32.xlu0 %v554, 64
          %v651 = vpop.permute.xlu0 %650
          %652 = vrot.lane.b32.xlu0 %v558, 64
          %v653 = vpop.permute.xlu0 %652
          %v656 = vmul.f32 %v646, %v651
          %v657 = vmul.f32 %v647, %v653
          %v658 = vlaneseq
          %v659 = vand.u32 %v658, 127
          %v660 = vstv %s31
          %vm661 = vcmp.eq.s32.totalorder %v659, %v660
          %v662 = vld [vmem:[%s307] sm:$0xff]
          %v663 = vld [vmem:[%s307 + $0x8] sm:$0xff]
          %v664 = vsel %vm661, %v662, 0.0
          %v665 = vsel %vm661, %v663, 0.0
          %vm666 = vcmask 31744
          %v667 = vsel %vm666, %v664, 0.0
          %668 = vadd.xlane.f32.xlu0 %v667
          %v669 = vpop.xlane.xlu0 %668
          %v670 = vsel %vm666, %v665, 0.0
          %671 = vadd.xlane.f32.xlu0 %v670
          %v672 = vpop.xlane.xlu0 %671
          %v673 = vld [vmem:[%s302] sm:$0xff]
          %v674 = vld [vmem:[%s302 + $0x8] sm:$0xff]
          %v675 = vld [vmem:[%s302 + $0x10] sm:$0xff]
          %v676 = vld [vmem:[%s302 + $0x18] sm:$0xff]
          %v677 = vld [vmem:[%s302 + $0x20] sm:$0xff]
          %v678 = vld [vmem:[%s302 + $0x28] sm:$0xff]
          %v679 = vld [vmem:[%s302 + $0x30] sm:$0xff]
          %v680 = vld [vmem:[%s302 + $0x38] sm:$0xff]
          %vm681 = vcmask 523264
          %v683 = vsel %vm681, %v656, 0
          %v686 = vsel %vm681, %v657, 0
          %688 = vmatpush.msra.mxu0 0.0
          %689 = vmatpush.msra.mxu0 0.0
          %690 = vmatpush.msra.mxu0 0.0
          %691 = vmatpush.msra.mxu0 0.0
          %692 = vmatpush.msra.mxu0 0.0
          %693 = vmatpush.msra.mxu0 0.0
          %694 = vmatpush.msra.mxu0 0.0
          %695 = vmatpush.msra.mxu0 0.0
          %v696 = vand.u32 %v680, 4294901760
          %697 = vmatpush.msra.mxu0 %v696
          %v698 = vand.u32 %v679, 4294901760
          %699 = vmatpush.msra.mxu0 %v698
          %v700 = vand.u32 %v678, 4294901760
          %701 = vmatpush.msra.mxu0 %v700
          %v702 = vand.u32 %v677, 4294901760
          %703 = vmatpush.msra.mxu0 %v702
          %v704 = vand.u32 %v676, 4294901760
          %705 = vmatpush.msra.mxu0 %v704
          %v706 = vand.u32 %v675, 4294901760
          %707 = vmatpush.msra.mxu0 %v706
          %v708 = vand.u32 %v674, 4294901760
          %709 = vmatpush.msra.mxu0 %v708
          %v710 = vand.u32 %v673, 4294901760
          %711 = vmatpush.msra.mxu0 %v710
          %v712 = vand.u32 %v683, 4294901760
          %v713 = vsub.f32 %v683, %v712
          %v714 = vand.u32 %v713, 4294901760
          %v715 = vsub.f32 %v713, %v714
          %v716 = vand.u32 %v715, 4294901760
          %717 = vmatmul.f32.gmra.mxu0 %v716
          %v718 = vpop.f32.mrf.mxu0
          %v719 = vadd.f32 0.0, %v718
          %v720 = vand.u32 %v686, 4294901760
          %v721 = vsub.f32 %v686, %v720
          %v722 = vand.u32 %v721, 4294901760
          %v723 = vsub.f32 %v721, %v722
          %v724 = vand.u32 %v723, 4294901760
          %725 = vmatmul.f32.gmra.mxu0 %v724
          %v726 = vpop.f32.mrf.mxu0
          %v727 = vadd.f32 0.0, %v726
          %728 = vdwg.mxu0
          %729 = vmatpush.msra.mxu0 0.0
          %730 = vmatpush.msra.mxu0 0.0
          %731 = vmatpush.msra.mxu0 0.0
          %732 = vmatpush.msra.mxu0 0.0
          %733 = vmatpush.msra.mxu0 0.0
          %734 = vmatpush.msra.mxu0 0.0
          %735 = vmatpush.msra.mxu0 0.0
          %736 = vmatpush.msra.mxu0 0.0
          %v737 = vand.u32 %v680, 4294901760
          %v738 = vsub.f32 %v680, %v737
          %v739 = vand.u32 %v738, 4294901760
          %v740 = vsub.f32 %v738, %v739
          %v741 = vand.u32 %v740, 4294901760
          %742 = vmatpush.msra.mxu0 %v741
          %v743 = vand.u32 %v679, 4294901760
          %v744 = vsub.f32 %v679, %v743
          %v745 = vand.u32 %v744, 4294901760
          %v746 = vsub.f32 %v744, %v745
          %v747 = vand.u32 %v746, 4294901760
          %748 = vmatpush.msra.mxu0 %v747
          %v749 = vand.u32 %v678, 4294901760
          %v750 = vsub.f32 %v678, %v749
          %v751 = vand.u32 %v750, 4294901760
          %v752 = vsub.f32 %v750, %v751
          %v753 = vand.u32 %v752, 4294901760
          %754 = vmatpush.msra.mxu0 %v753
          %v755 = vand.u32 %v677, 4294901760
          %v756 = vsub.f32 %v677, %v755
          %v757 = vand.u32 %v756, 4294901760
          %v758 = vsub.f32 %v756, %v757
          %v759 = vand.u32 %v758, 4294901760
          %760 = vmatpush.msra.mxu0 %v759
          %v761 = vand.u32 %v676, 4294901760
          %v762 = vsub.f32 %v676, %v761
          %v763 = vand.u32 %v762, 4294901760
          %v764 = vsub.f32 %v762, %v763
          %v765 = vand.u32 %v764, 4294901760
          %766 = vmatpush.msra.mxu0 %v765
          %v767 = vand.u32 %v675, 4294901760
          %v768 = vsub.f32 %v675, %v767
          %v769 = vand.u32 %v768, 4294901760
          %v770 = vsub.f32 %v768, %v769
          %v771 = vand.u32 %v770, 4294901760
          %772 = vmatpush.msra.mxu0 %v771
          %v773 = vand.u32 %v674, 4294901760
          %v774 = vsub.f32 %v674, %v773
          %v775 = vand.u32 %v774, 4294901760
          %v776 = vsub.f32 %v774, %v775
          %v777 = vand.u32 %v776, 4294901760
          %778 = vmatpush.msra.mxu0 %v777
          %v779 = vand.u32 %v673, 4294901760
          %v780 = vsub.f32 %v673, %v779
          %v781 = vand.u32 %v780, 4294901760
          %v782 = vsub.f32 %v780, %v781
          %v783 = vand.u32 %v782, 4294901760
          %784 = vmatpush.msra.mxu0 %v783
          %v785 = vand.u32 %v683, 4294901760
          %786 = vmatmul.f32.gmra.mxu0 %v785
          %v787 = vpop.f32.mrf.mxu0
          %v788 = vadd.f32 %v719, %v787
          %v789 = vand.u32 %v686, 4294901760
          %790 = vmatmul.f32.gmra.mxu0 %v789
          %v791 = vpop.f32.mrf.mxu0
          %v792 = vadd.f32 %v727, %v791
          %793 = vdwg.mxu0
          %794 = vmatpush.msra.mxu0 0.0
          %795 = vmatpush.msra.mxu0 0.0
          %796 = vmatpush.msra.mxu0 0.0
          %797 = vmatpush.msra.mxu0 0.0
          %798 = vmatpush.msra.mxu0 0.0
          %799 = vmatpush.msra.mxu0 0.0
          %800 = vmatpush.msra.mxu0 0.0
          %801 = vmatpush.msra.mxu0 0.0
          %v802 = vand.u32 %v680, 4294901760
          %v803 = vsub.f32 %v680, %v802
          %804 = vmatpush.msra.mxu0 %v803
          %v805 = vand.u32 %v679, 4294901760
          %v806 = vsub.f32 %v679, %v805
          %807 = vmatpush.msra.mxu0 %v806
          %v808 = vand.u32 %v678, 4294901760
          %v809 = vsub.f32 %v678, %v808
          %810 = vmatpush.msra.mxu0 %v809
          %v811 = vand.u32 %v677, 4294901760
          %v812 = vsub.f32 %v677, %v811
          %813 = vmatpush.msra.mxu0 %v812
          %v814 = vand.u32 %v676, 4294901760
          %v815 = vsub.f32 %v676, %v814
          %816 = vmatpush.msra.mxu0 %v815
          %v817 = vand.u32 %v675, 4294901760
          %v818 = vsub.f32 %v675, %v817
          %819 = vmatpush.msra.mxu0 %v818
          %v820 = vand.u32 %v674, 4294901760
          %v821 = vsub.f32 %v674, %v820
          %822 = vmatpush.msra.mxu0 %v821
          %v823 = vand.u32 %v673, 4294901760
          %v824 = vsub.f32 %v673, %v823
          %825 = vmatpush.msra.mxu0 %v824
          %v826 = vand.u32 %v683, 4294901760
          %v827 = vsub.f32 %v683, %v826
          %828 = vmatmul.f32.gmra.mxu0 %v827
          %v829 = vpop.f32.mrf.mxu0
          %v830 = vadd.f32 %v788, %v829
          %v831 = vand.u32 %v686, 4294901760
          %v832 = vsub.f32 %v686, %v831
          %833 = vmatmul.f32.gmra.mxu0 %v832
          %v834 = vpop.f32.mrf.mxu0
          %v835 = vadd.f32 %v792, %v834
          %836 = vdwg.mxu0
          %837 = vmatpush.msra.mxu0 0.0
          %838 = vmatpush.msra.mxu0 0.0
          %839 = vmatpush.msra.mxu0 0.0
          %840 = vmatpush.msra.mxu0 0.0
          %841 = vmatpush.msra.mxu0 0.0
          %842 = vmatpush.msra.mxu0 0.0
          %843 = vmatpush.msra.mxu0 0.0
          %844 = vmatpush.msra.mxu0 0.0
          %v845 = vand.u32 %v680, 4294901760
          %846 = vmatpush.msra.mxu0 %v845
          %v847 = vand.u32 %v679, 4294901760
          %848 = vmatpush.msra.mxu0 %v847
          %v849 = vand.u32 %v678, 4294901760
          %850 = vmatpush.msra.mxu0 %v849
          %v851 = vand.u32 %v677, 4294901760
          %852 = vmatpush.msra.mxu0 %v851
          %v853 = vand.u32 %v676, 4294901760
          %854 = vmatpush.msra.mxu0 %v853
          %v855 = vand.u32 %v675, 4294901760
          %856 = vmatpush.msra.mxu0 %v855
          %v857 = vand.u32 %v674, 4294901760
          %858 = vmatpush.msra.mxu0 %v857
          %v859 = vand.u32 %v673, 4294901760
          %860 = vmatpush.msra.mxu0 %v859
          %v861 = vand.u32 %v683, 4294901760
          %v862 = vsub.f32 %v683, %v861
          %v863 = vand.u32 %v862, 4294901760
          %864 = vmatmul.f32.gmra.mxu0 %v863
          %v865 = vpop.f32.mrf.mxu0
          %v866 = vadd.f32 %v830, %v865
          %v867 = vand.u32 %v686, 4294901760
          %v868 = vsub.f32 %v686, %v867
          %v869 = vand.u32 %v868, 4294901760
          %870 = vmatmul.f32.gmra.mxu0 %v869
          %v871 = vpop.f32.mrf.mxu0
          %v872 = vadd.f32 %v835, %v871
          %873 = vdwg.mxu0
          %874 = vmatpush.msra.mxu0 0.0
          %875 = vmatpush.msra.mxu0 0.0
          %876 = vmatpush.msra.mxu0 0.0
          %877 = vmatpush.msra.mxu0 0.0
          %878 = vmatpush.msra.mxu0 0.0
          %879 = vmatpush.msra.mxu0 0.0
          %880 = vmatpush.msra.mxu0 0.0
          %881 = vmatpush.msra.mxu0 0.0
          %v882 = vand.u32 %v680, 4294901760
          %v883 = vsub.f32 %v680, %v882
          %v884 = vand.u32 %v883, 4294901760
          %885 = vmatpush.msra.mxu0 %v884
          %v886 = vand.u32 %v679, 4294901760
          %v887 = vsub.f32 %v679, %v886
          %v888 = vand.u32 %v887, 4294901760
          %889 = vmatpush.msra.mxu0 %v888
          %v890 = vand.u32 %v678, 4294901760
          %v891 = vsub.f32 %v678, %v890
          %v892 = vand.u32 %v891, 4294901760
          %893 = vmatpush.msra.mxu0 %v892
          %v894 = vand.u32 %v677, 4294901760
          %v895 = vsub.f32 %v677, %v894
          %v896 = vand.u32 %v895, 4294901760
          %897 = vmatpush.msra.mxu0 %v896
          %v898 = vand.u32 %v676, 4294901760
          %v899 = vsub.f32 %v676, %v898
          %v900 = vand.u32 %v899, 4294901760
          %901 = vmatpush.msra.mxu0 %v900
          %v902 = vand.u32 %v675, 4294901760
          %v903 = vsub.f32 %v675, %v902
          %v904 = vand.u32 %v903, 4294901760
          %905 = vmatpush.msra.mxu0 %v904
          %v906 = vand.u32 %v674, 4294901760
          %v907 = vsub.f32 %v674, %v906
          %v908 = vand.u32 %v907, 4294901760
          %909 = vmatpush.msra.mxu0 %v908
          %v910 = vand.u32 %v673, 4294901760
          %v911 = vsub.f32 %v673, %v910
          %v912 = vand.u32 %v911, 4294901760
          %913 = vmatpush.msra.mxu0 %v912
          %v914 = vand.u32 %v683, 4294901760
          %915 = vmatmul.f32.gmra.mxu0 %v914
          %v916 = vpop.f32.mrf.mxu0
          %v917 = vadd.f32 %v866, %v916
          %v918 = vand.u32 %v686, 4294901760
          %919 = vmatmul.f32.gmra.mxu0 %v918
          %v920 = vpop.f32.mrf.mxu0
          %v921 = vadd.f32 %v872, %v920
          %922 = vdwg.mxu0
          %923 = vmatpush.msra.mxu0 0.0
          %924 = vmatpush.msra.mxu0 0.0
          %925 = vmatpush.msra.mxu0 0.0
          %926 = vmatpush.msra.mxu0 0.0
          %927 = vmatpush.msra.mxu0 0.0
          %928 = vmatpush.msra.mxu0 0.0
          %929 = vmatpush.msra.mxu0 0.0
          %930 = vmatpush.msra.mxu0 0.0
          %v931 = vand.u32 %v680, 4294901760
          %932 = vmatpush.msra.mxu0 %v931
          %v933 = vand.u32 %v679, 4294901760
          %934 = vmatpush.msra.mxu0 %v933
          %v935 = vand.u32 %v678, 4294901760
          %936 = vmatpush.msra.mxu0 %v935
          %v937 = vand.u32 %v677, 4294901760
          %938 = vmatpush.msra.mxu0 %v937
          %v939 = vand.u32 %v676, 4294901760
          %940 = vmatpush.msra.mxu0 %v939
          %v941 = vand.u32 %v675, 4294901760
          %942 = vmatpush.msra.mxu0 %v941
          %v943 = vand.u32 %v674, 4294901760
          %944 = vmatpush.msra.mxu0 %v943
          %v945 = vand.u32 %v673, 4294901760
          %946 = vmatpush.msra.mxu0 %v945
          %v947 = vand.u32 %v683, 4294901760
          %948 = vmatmul.f32.gmra.mxu0 %v947
          %v949 = vpop.f32.mrf.mxu0
          %v950 = vadd.f32 %v917, %v949
          %v951 = vand.u32 %v686, 4294901760
          %952 = vmatmul.f32.gmra.mxu0 %v951
          %v953 = vpop.f32.mrf.mxu0
          %v954 = vadd.f32 %v921, %v953
          %955 = vdwg.mxu0
          %v956 = vld [vmem:[#allocation2] sm:$0xff]
          %v957 = vld [vmem:[#allocation2 + $0x8] sm:$0xff]
          %v958 = vmul.f32 %v950, %v669
          %v959 = vmul.f32 %v954, %v672
          %v960 = vadd.f32 %v956, %v958
          %v961 = vadd.f32 %v957, %v959
          %962 = vst.msk [vmem:[#allocation2] sm:$0xff] %vm337, %v960
          %963 = vst.msk [vmem:[#allocation2 + $0x8] sm:$0xff] %vm337, %v961
        $region44: #{moe_block_forward.1} parent=35 // pred_fallthru
          _
        %p964 = scmp.eq.s32.totalorder %s31, 3
        %p965 = pnand %p964, %p311
        %p966 = pneg %p965
        // Predicated region
        $region45: #{moe_block_forward.1} parent=35 // pred_check
          _
        $region46: #{moe_block_forward.1} parent=35 // pred_check_branch
          %968 = sbr.rel (%p965) target = $region48
        $region47: #{moe_block_forward.1} parent=35 // pred_region
          %v969 = vld [vmem:[#allocation2] sm:$0xff]
          %v970 = vld [vmem:[#allocation2 + $0x8] sm:$0xff]
          %vm971 = vcmask 261120
          %972 = vst.msk [vmem:[#allocation5] sm:$0xff] %vm971, %v969
          %973 = vst.msk [vmem:[#allocation5 + $0x8] sm:$0xff] %vm971, %v970
        $region48: #{moe_block_forward.1} parent=35 // pred_fallthru
          _
        // Predicated region
        $region49: #{moe_block_forward.1} parent=35 // pred_check
          %p974 = pneg %p170
        $region50: #{moe_block_forward.1} parent=35 // pred_check_branch
          %976 = sbr.rel (%p974) target = $region52
        $region51: #{moe_block_forward.1} parent=35 // pred_region
          %s977 = smul.u32 2, %s30
          %979 = vsyncadd [#allocation6], 0
          %s980 = smul.addr %s977, 8
          %s981 = scalar_lea.hbm %s5, %s980
          %s982 = sshll.u32 [#allocation5], 4
          %s983 = int_to_ptr.vmem [resolvable:$true] %s982
          %s984 = sshll.u32 %s981, 4
          %s985 = int_to_ptr.hbm [resolvable:$true] %s984
          %990 = dma.vmem_to_hbm [thread:$0]  %s983, 256, %s985, [#allocation6], 128, 128, 8
        $region52: #{moe_block_forward.1} parent=35 // pred_fallthru
          _
        // Predicated region
        $region53: #{moe_block_forward.1} parent=35 // pred_check
          %p991 = pneg %p170
        $region54: #{moe_block_forward.1} parent=35 // pred_check_branch
          %993 = sbr.rel (%p991) target = $region56
        $region55: #{moe_block_forward.1} parent=35 // pred_region
          %995 = dma.done [#allocation6], 256
        $region56: #{moe_block_forward.1} parent=35 // pred_fallthru
          _
      $region36: #{moe_block_forward.1} parent=5 // pred_fallthru
        _
      %p996 = scmp.le.s32.totalorder 2, %s20
      // Predicated region
      $region57: #{moe_block_forward.1} parent=5 // pred_check
        %p997 = pneg %p996
      $region58: #{moe_block_forward.1} parent=5 // pred_check_branch
        %999 = sbr.rel (%p997) target = $region60
      $region59: #{moe_block_forward.1} parent=5 // pred_region
        %s1000 = ssub.s32 %s20, 2
      $region60: #{moe_block_forward.1} parent=5 // pred_fallthru
        _
    $region6: #{moe_block_forward.1} parent=1 // loop_footer
      %s24 = sadd.s32 1, %s20
    $region7: #{moe_block_forward.1} parent=1 // loop_footer_branch
      %19 = sbr.rel target = $region3
    $region8: #{moe_block_forward.1} parent=1 // loop_exit
      _
    %1001 = vsyncpa [#allocation6], 1
    %s1002 = scalar_lea.sflag [#allocation6], 1
    %1003 = vsyncpa %s1002, 1

</llo_original>
